<compile_context>
chip_gen: v7x
topology: tpu7x:2x2x1
jax: 0.10.0
libtpu: 0.0.40
codegen_flags: <defaults>
</compile_context>

<pallas_src>
import jax
import jax.numpy as jnp
from jax.experimental import pallas as pl
from jax.experimental.pallas import tpu as pltpu


def _round_up(a, b):
    return (a + b - 1) // b * b


def _sublanes(dtype):
    """Dtype-aware sublane count: 8 for 4-byte, 16 for bf16, 32 for int8/fp8."""
    es = jnp.dtype(dtype).itemsize
    return max(8, 32 // es)


def _tpu_params():
    """(vmem_capacity_bytes, tensorcore_count) with conservative fallbacks."""
    vmem_cap = 64 << 20          # v7x per-core physical VMEM (smallest of the three)
    num_cores = 2                # prefer even step counts; harmless on 1-TC chips
    try:
        info = pltpu.get_tpu_info()
        vmem_cap = int(getattr(info, "vmem_capacity_bytes", vmem_cap))
        num_cores = int(getattr(info, "num_cores",
                                getattr(info, "tensorcore_count", num_cores)))
        num_cores = max(1, num_cores)
    except Exception:
        pass
    return vmem_cap, num_cores


def _pick_block_batch(B, bytes_per_item, *, vmem_budget, num_cores,
                      sublane=None, min_step_bytes=1 << 20):
    """Largest divisor of B whose double-buffered in+out blocks fit the budget.

    sublane: if set, the block-batch dim is second-minor in a 2-D block and
      must be a multiple of the dtype sublane count or equal to B.
    Prefers a grid length that is a multiple of num_cores (megacore balance),
    but only when each step still moves >= min_step_bytes (don't over-split
    tiny workloads into overhead-bound steps on v7x).
    """
    cands = [d for d in range(1, B + 1)
             if B % d == 0 and (sublane is None or d == B or d % sublane == 0)]
    fitting = [d for d in cands if 4 * d * bytes_per_item <= vmem_budget]
    if not fitting:
        return min(cands)           # caller sets vmem_limit_bytes from `need`
    balanced = [d for d in fitting
                if (B // d) >= num_cores and (B // d) % num_cores == 0
                and d * bytes_per_item >= min_step_bytes]
    pool = balanced if balanced else fitting
    return max(pool)


def _vmem_limit(need, vmem_cap):
    return int(min(max(need, 16 << 20), max(vmem_cap - (8 << 20), 16 << 20)))


def _add_prompt_kernel(x_ref, p_ref, o_ref):
    # Single store per output element; prompt block broadcasts over the
    # leading batch dim of the x block.
    o_ref[...] = x_ref[...] + p_ref[...]


def _prompter_corner_inplace(x, patch):
    """Output aliases x; only the top-left corner rows are read and written."""
    B, C, H, W = x.shape
    P = patch.shape[-1]
    dt = x.dtype
    es = jnp.dtype(dt).itemsize
    sub = _sublanes(dt)
    R = min(_round_up(P, sub), H)            # dtype-aligned corner rows

    # Zero-padded prompt covering only the corner rows (tiny; fuses under jit).
    patch_blk = jnp.zeros((1, C, R, W), dt).at[:, :, :P, :P].set(patch.astype(dt))

    vmem_cap, num_cores = _tpu_params()
    budget = min(vmem_cap // 4, 24 << 20)

    lane_dense = ((R * W) % 128 == 0) or (R == H)

    if lane_dense:
        # Lane-dense corner: flatten H,W so the block's last dim is R*W
        # (multiple of 128 -> unmasked stores, contiguous R*W-element DMA runs).
        x_in = x.reshape(B, C, H * W)
        p_in = patch_blk.reshape(1, C, R * W)
        item_vmem = _round_up(C, sub) * _round_up(R * W, 128) * es
        bb = _pick_block_batch(B, item_vmem, vmem_budget=budget,
                               num_cores=num_cores)
        in_specs = [pl.BlockSpec((bb, C, R * W), lambda b: (b, 0, 0)),
                    pl.BlockSpec((1, C, R * W), lambda b: (0, 0, 0))]
        out_spec = pl.BlockSpec((bb, C, R * W), lambda b: (b, 0, 0))
        out_shape = jax.ShapeDtypeStruct((B, C, H * W), dt)
    else:
        # R*W not lane-aligned: keep the 4-D corner block (W == full dim).
        x_in = x
        p_in = patch_blk
        item_vmem = C * _round_up(R, sub) * _round_up(W, 128) * es
        bb = _pick_block_batch(B, item_vmem, vmem_budget=budget,
                               num_cores=num_cores)
        in_specs = [pl.BlockSpec((bb, C, R, W), lambda b: (b, 0, 0, 0)),
                    pl.BlockSpec((1, C, R, W), lambda b: (0, 0, 0, 0))]
        out_spec = pl.BlockSpec((bb, C, R, W), lambda b: (b, 0, 0, 0))
        out_shape = jax.ShapeDtypeStruct((B, C, H, W), dt)

    prompt_vmem = 2 * _round_up(C, sub) * _round_up(R * W, 128) * es
    need = 4 * bb * item_vmem + prompt_vmem + (2 << 20)

    cost = pl.CostEstimate(
        flops=B * C * R * W,
        transcendentals=0,
        bytes_accessed=(2 * B + 1) * C * R * W * es)

    out = pl.pallas_call(
        _add_prompt_kernel,
        out_shape=out_shape,
        grid_spec=pltpu.PrefetchScalarGridSpec(
            num_scalar_prefetch=0,
            grid=(B // bb,),
            in_specs=in_specs,
            out_specs=out_spec),
        # Output shares x's HBM buffer: pixels outside the corner blocks are
        # never DMA'd and retain x's values.
        input_output_aliases={0: 0},
        compiler_params=pltpu.CompilerParams(
            dimension_semantics=("parallel",),
            vmem_limit_bytes=_vmem_limit(need, vmem_cap)),
        cost_estimate=cost,
    )(x_in, p_in)
    return out.reshape(B, C, H, W)


def _prompter_full_add(x, patch):
    """Full lane-dense add; x is left untouched (no aliasing)."""
    B, C, H, W = x.shape
    P = patch.shape[-1]
    dt = x.dtype
    es = jnp.dtype(dt).itemsize
    sub = _sublanes(dt)
    CHW = C * H * W

    prompt = jnp.zeros((1, C, H, W), dt).at[:, :, :P, :P].set(patch.astype(dt))

    vmem_cap, num_cores = _tpu_params()
    budget = min(vmem_cap // 4, 24 << 20)

    if CHW % (sub * 128) == 0:
        # [B, sub, CHW/sub]: prompt block fills all sublanes -> no 8x padding
        # of the broadcast operand, and the last dim is a multiple of 128.
        N = CHW // sub
        x2 = x.reshape(B, sub, N)
        p2 = prompt.reshape(1, sub, N)
        item = sub * N * es
        prompt_vmem = 2 * sub * N * es
        bb = _pick_block_batch(B, item,
                               vmem_budget=max(budget - prompt_vmem, 2 << 20),
                               num_cores=num_cores)
        in_specs = [pl.BlockSpec((bb, sub, N), lambda b: (b, 0, 0)),
                    pl.BlockSpec((1, sub, N), lambda b: (0, 0, 0))]
        out_spec = pl.BlockSpec((bb, sub, N), lambda b: (b, 0, 0))
        out_shape = jax.ShapeDtypeStruct((B, sub, N), dt)
    else:
        # Flat [B, CHW]: lane-dense (last dim == full array dim); the block
        # batch dim must obey the dtype sublane rule.
        x2 = x.reshape(B, CHW)
        p2 = prompt.reshape(1, CHW)
        item = _round_up(CHW, 128) * es
        prompt_vmem = 2 * sub * _round_up(CHW, 128) * es   # 1 row pads to `sub`
        bb = _pick_block_batch(B, item,
                               vmem_budget=max(budget - prompt_vmem, 2 << 20),
                               num_cores=num_cores, sublane=sub)
        in_specs = [pl.BlockSpec((bb, CHW), lambda b: (b, 0)),
                    pl.BlockSpec((1, CHW), lambda b: (0, 0))]
        out_spec = pl.BlockSpec((bb, CHW), lambda b: (b, 0))
        out_shape = jax.ShapeDtypeStruct((B, CHW), dt)

    need = 4 * bb * item + prompt_vmem + (2 << 20)

    cost = pl.CostEstimate(
        flops=B * CHW,
        transcendentals=0,
        bytes_accessed=(2 * B + 1) * CHW * es)

    out2 = pl.pallas_call(
        _add_prompt_kernel,
        out_shape=out_shape,
        grid_spec=pltpu.PrefetchScalarGridSpec(
            num_scalar_prefetch=0,
            grid=(B // bb,),
            in_specs=in_specs,
            out_specs=out_spec),
        compiler_params=pltpu.CompilerParams(
            dimension_semantics=("parallel",),
            vmem_limit_bytes=_vmem_limit(need, vmem_cap)),
        cost_estimate=cost,
    )(x2, p2)
    return out2.reshape(B, C, H, W)


def fixed_patch_prompter(x, patch, *, donate_x=True):
    """x: [B, C, H, W], patch: [1, C, P, P] -> x + zero-padded top-left patch.

    donate_x=True: output aliases x's buffer and only the corner is DMA'd.
    For the traffic saving to be real, donate x at the jit boundary
    (jax.jit(..., donate_argnums=...)); otherwise XLA copies x defensively
    (still correct, just full-bandwidth).
    """
    B, C, H, W = x.shape
    assert patch.ndim == 4 and patch.shape[0] == 1 and patch.shape[1] == C
    P = patch.shape[-1]
    assert patch.shape[2] == P and P <= H and P <= W
    # TODO(synk): for tiny inputs (a few KiB) a plain x.at[:, :, :P, :P].add(patch)
    # beats any kernel launch; kept on the Pallas path so the demo exercises it.
    if donate_x:
        return _prompter_corner_inplace(x, patch)
    return _prompter_full_add(x, patch)


if __name__ == "__main__":
    key = jax.random.PRNGKey(0)
    kx, kp = jax.random.split(key)

    # Small config consistent with the module: isize=16, NUM_TOKENS=4, 3 channels.
    B, C, H, W = 2, 3, 16, 16
    P = 4

    x = jax.random.normal(kx, (B, C, H, W), dtype=jnp.float32)
    # Parameter init mirrors nn.Parameter(torch.randn([1, 3, psize, psize])).
    patch = jax.random.normal(kp, (1, C, P, P), dtype=jnp.float32)

    # Reference (plain JAX), computed before any kernel call.
    prompt_ref = jnp.zeros((1, C, H, W), jnp.float32).at[:, :, :P, :P].set(patch)
    ref = x + prompt_ref

    # jit the wrappers so the padded-prompt construction fuses with the kernel.
    full_fn = jax.jit(lambda xx, pp: fixed_patch_prompter(xx, pp, donate_x=False))
    corner_fn = jax.jit(lambda xx, pp: fixed_patch_prompter(xx, pp, donate_x=True))

    # Non-donating lane-dense path first (leaves x untouched) ...
    out_full = jax.block_until_ready(full_fn(x, patch))
    assert out_full.shape == (B, C, H, W)
    assert jnp.allclose(out_full, ref, atol=1e-6), "full-add path mismatch"

    # ... then the corner-only aliased path (x is not used afterwards).
    out_corner = jax.block_until_ready(corner_fn(x, patch))
    assert out_corner.shape == (B, C, H, W)
    assert jnp.allclose(out_corner, ref, atol=1e-6), "corner in-place path mismatch"

    print("KERNEL_OK")
</pallas_src>

<mosaic_0001>
module attributes {stable_mosaic.version = 11 : i64} {
  func.func @_add_prompt_kernel(%arg0: i32, %arg1: memref<2x768xf32, #tpu.memory_space<vmem>>, %arg2: memref<1x768xf32, #tpu.memory_space<vmem>>, %arg3: memref<2x768xf32, #tpu.memory_space<vmem>>) attributes {dimension_semantics = [#tpu.dimension_semantics<parallel>], iteration_bounds = array<i64: 1>, scalar_prefetch = 0 : i64, scratch_operands = 0 : i64, tpu.core_type = #tpu.core_type<tc>, window_params = [{transform_indices = @transform_0, window_bounds = array<i64: 2, 768>}, {pipeline_mode = #tpu.pipeline_mode<synchronous>, transform_indices = @transform_1, window_bounds = array<i64: 1, 768>}, {transform_indices = @transform_2, window_bounds = array<i64: 2, 768>}]} {
    %c0 = arith.constant 0 : index
    %c0_0 = arith.constant 0 : index
    %0 = vector.load %arg1[%c0, %c0_0] : memref<2x768xf32, #tpu.memory_space<vmem>>, vector<2x768xf32>
    %c0_1 = arith.constant 0 : index
    %c0_2 = arith.constant 0 : index
    %1 = vector.load %arg2[%c0_1, %c0_2] : memref<1x768xf32, #tpu.memory_space<vmem>>, vector<1x768xf32>
    %2 = vector.broadcast %1 : vector<1x768xf32> to vector<2x768xf32>
    %3 = arith.addf %0, %2 : vector<2x768xf32>
    %c0_3 = arith.constant 0 : index
    %c0_4 = arith.constant 0 : index
    %4 = vector.load %arg3[%c0_3, %c0_4] : memref<2x768xf32, #tpu.memory_space<vmem>>, vector<2x768xf32>
    tpu.vector_store %arg3[%c0_3, %c0_4], %3 {strides = array<i32>} : memref<2x768xf32, #tpu.memory_space<vmem>>, vector<2x768xf32>,
    return
  }
  func.func @transform_0(%arg0: i32) -> (i32, i32) {
    %c0_i32 = arith.constant 0 : i32
    %c0_i32_0 = arith.constant 0 : i32
    return %arg0, %c0_i32 : i32, i32
  }
  func.func @transform_1(%arg0: i32) -> (i32, i32) {
    %c0_i32 = arith.constant 0 : i32
    %c0_i32_0 = arith.constant 0 : i32
    %c0_i32_1 = arith.constant 0 : i32
    return %c0_i32, %c0_i32_0 : i32, i32
  }
  func.func @transform_2(%arg0: i32) -> (i32, i32) {
    %c0_i32 = arith.constant 0 : i32
    %c0_i32_0 = arith.constant 0 : i32
    return %arg0, %c0_i32 : i32, i32
  }
}

</mosaic_0001>

<llo_original>
// kernel: _lambda_.1
$region0: #{_lambda_.1}
  #allocation0 [shape = 'u32[]', space=smem, size = 0x4, offset = 0x4, fixed_abs, tag = 'smem constant byte address 0x4 - core index']
  #allocation1 [shape = 'u32[144,128]{1,0:T(1,128)}', space=vmem, size = 0x12000, scoped, tag = 'internal scratch']
  %s0 = inlined_call_operand.vmem [shape: f32[2,768], index: 0, kind: input, shape index: {}]
  %s1 = inlined_call_operand.vmem [shape: f32[1,768], index: 1, kind: input, shape index: {}]
  %s2 = inlined_call_operand.vmem [shape: f32[2,768], index: 2, kind: output, shape index: {}]
  %s3 = sld [smem:[#allocation0]]
  $region18: #{_lambda_.1} parent=0
    _
  %s5 = ssub.s32 1, %s3
  %s6 = scalar_select 0, %s5, %s3
  // Predicated region
  $region2: #{_lambda_.1} parent=0 // pred_check
    _
  $region3: #{_lambda_.1} parent=0 // pred_check_branch
    %8 = sbr.rel (0) target = $region5
  $region4: #{_lambda_.1} parent=0 // pred_region
    _
  $region5: #{_lambda_.1} parent=0 // pred_fallthru
    _
  // Predicated region
  $region6: #{_lambda_.1} parent=0 // pred_check
    _
  $region7: #{_lambda_.1} parent=0 // pred_check_branch
    %10 = sbr.rel (0) target = $region9
  $region8: #{_lambda_.1} parent=0 // pred_region
    _
  $region9: #{_lambda_.1} parent=0 // pred_fallthru
    _
  %v11 = vld [vmem:[%s0] sm:$0xff]
  %v12 = vld [vmem:[%s0 + $0x8] sm:$0xf]
  %v13 = vld [vmem:[%s1] sm:$0x3f]
  %v15 = vlaneseq
  %v16 = vshrl.u32 %v15, 7
  %v17 = vsub.s32 0, %v16
  %v18 = vrot.slane %v13, %v17
  %v19 = vlaneseq
  %v20 = vshrl.u32 %v19, 7
  %v21 = vsub.s32 1, %v20
  %v22 = vrot.slane %v13, %v21
  %v23 = vlaneseq
  %v24 = vshrl.u32 %v23, 7
  %v25 = vsub.s32 2, %v24
  %v26 = vrot.slane %v13, %v25
  %v27 = vlaneseq
  %v28 = vshrl.u32 %v27, 7
  %v29 = vsub.s32 3, %v28
  %v30 = vrot.slane %v13, %v29
  %v31 = vlaneseq
  %v32 = vshrl.u32 %v31, 7
  %v33 = vsub.s32 4, %v32
  %v34 = vrot.slane %v13, %v33
  %v35 = vlaneseq
  %v36 = vshrl.u32 %v35, 7
  %v37 = vsub.s32 5, %v36
  %v38 = vrot.slane %v13, %v37
  %v39 = vcombine.low %v18, %v22
  %v40 = vcombine.low %v26, %v30
  %v42 = vunpack.c.l.s4 1983009808
  %v43 = vunpack.c.0.s8 %v42
  %v44 = vlaneseq
  %v45 = vshrl.u32 %v44, 7
  %v46 = vsub.s32 %v43, %v45
  %v47 = vrot.slane %v39, %v46
  %v49 = vunpack.c.l.s4 1983009808
  %v50 = vunpack.c.0.s8 %v49
  %v51 = vlaneseq
  %v52 = vshrl.u32 %v51, 7
  %v53 = vsub.s32 %v50, %v52
  %v54 = vrot.slane %v40, %v53
  %v55 = vcombine.low %v47, %v54
  %v56 = vcombine.low %v34, %v38
  %v58 = vunpack.c.l.s4 1983009808
  %v59 = vunpack.c.0.s8 %v58
  %v60 = vlaneseq
  %v61 = vshrl.u32 %v60, 7
  %v62 = vsub.s32 %v59, %v61
  %v63 = vrot.slane %v56, %v62
  %v66 = vadd.f32 %v11, %v55
  %v67 = vadd.f32 %v12, %v63
  %68 = vst [vmem:[%s2] sm:$0xff] %v66
  %69 = vst [vmem:[%s2 + $0x8] sm:$0xf] %v67
  // Predicated region
  $region10: #{_lambda_.1} parent=0 // pred_check
    _
  $region11: #{_lambda_.1} parent=0 // pred_check_branch
    %71 = sbr.rel (0) target = $region13
  $region12: #{_lambda_.1} parent=0 // pred_region
    _
  $region13: #{_lambda_.1} parent=0 // pred_fallthru
    _
  // Predicated region
  $region14: #{_lambda_.1} parent=0 // pred_check
    _
  $region15: #{_lambda_.1} parent=0 // pred_check_branch
    %73 = sbr.rel (0) target = $region17
  $region16: #{_lambda_.1} parent=0 // pred_region
    _
  $region17: #{_lambda_.1} parent=0 // pred_fallthru
    _

</llo_original>
